<compile_context>
chip_gen: v5e
topology: v5e:2x2
jax: 0.10.0
libtpu: 0.0.40
codegen_flags: <defaults>
</compile_context>

<pallas_src>
import jax
import jax.numpy as jnp
from jax.experimental import pallas as pl
from jax.experimental.pallas import tpu as pltpu

# ---------------- model dimensions (small, consistent with the module) ----------------
B = 2            # batch
C_IN = 4         # input channels
H = W = 16       # spatial
KH = KW = 3      # conv kernel
FEAT = 32        # netF feature dim
BOTTLENECK = 16  # args.bottleneck_dim
NUM_CLASSES = 8  # netC output dim
BN_EPS = 1e-5

# ---------------- kernel layout constants ----------------------------------------------
HW = H * W                                   # 256 valid pixels per image
R_VALID = B * HW                             # 512 conv output rows (only valid rows)
K_RAW = KH * KW * C_IN                       # 36 = taps packed into the MXU K dim
K_PAD = 128                                  # lane-dense K (zero-padded 36 -> 128)
OUT_ROWS = 8                                 # logits slab sublanes
OUT_LANES = 128                              # logits slab lanes (lane-dense store)
MXU_DTYPE = jnp.float32                      # set jnp.bfloat16 on v6e/v7x at real sizes


# ------------------------------- Pallas kernel ----------------------------------------
def _dino_kernel(x_ref, wc_ref, bc_ref, w1_ref, w2e_ref, b2e_ref, out_ref):
    # ---- netF conv3x3: ONE K-packed MXU matmul over only the 512 valid rows -----------
    feat = jnp.maximum(
        jnp.dot(x_ref[...], wc_ref[...], preferred_element_type=jnp.float32)
        + bc_ref[...],
        0.0)                                                       # [512, FEAT] f32

    # ---- netF global average pool: plain per-batch sublane reduce (no mask, no MXU) ---
    pooled = jnp.concatenate(
        [jnp.sum(feat[b * HW:(b + 1) * HW, :], axis=0, keepdims=True) for b in range(B)],
        axis=0) * (1.0 / HW)                                       # [B, FEAT] f32

    # ---- netB: Linear (bias dropped: cancels in BN) + BatchNorm1d batch stats ---------
    h = jnp.dot(pooled.astype(w1_ref.dtype), w1_ref[...],
                preferred_element_type=jnp.float32)                # [B, BOTTLENECK]
    mu = jnp.mean(h, axis=0, keepdims=True)
    var = jnp.mean(jnp.square(h - mu), axis=0, keepdims=True)      # biased, like PyTorch
    hn = (h - mu) * jax.lax.rsqrt(var + BN_EPS)

    # ---- netC: Linear with BN gamma/beta pre-folded; lane-dense [8,128] store ---------
    hn_pad = jnp.concatenate(
        [hn, jnp.zeros((OUT_ROWS - B, BOTTLENECK), jnp.float32)], axis=0)   # [8, BN]
    out_ref[...] = (jnp.dot(hn_pad, w2e_ref[...], preferred_element_type=jnp.float32)
                    + b2e_ref[...])                                # [8, 128]


# ------------------------------- wrapper (glue) ----------------------------------------
def _pack_patches(img_nchw):
    """NCHW image -> tap-packed im2col LHS [R_VALID, K_PAD] (lane-dense, valid rows only)."""
    x = jnp.transpose(img_nchw, (0, 2, 3, 1)).astype(jnp.float32)           # [B,H,W,C]
    xp = jnp.pad(x, ((0, 0), (1, 1), (1, 1), (0, 0)))                       # [B,H+2,W+2,C]
    cols = [xp[:, dh:dh + H, dw:dw + W, :] for dh in range(KH) for dw in range(KW)]
    patches = jnp.concatenate(cols, axis=-1).reshape(R_VALID, K_RAW)        # [512, 36]
    patches = jnp.pad(patches, ((0, 0), (0, K_PAD - K_RAW)))                # [512, 128]
    return patches.astype(MXU_DTYPE)


def fold_params(params):
    """One-time folding (hoisted out of the per-call jit): pad conv weights to the packed
    K layout, fold BN gamma/beta into netC, drop b1 (cancels under batch-stat BN)."""
    wc = jnp.pad(params["w_conv"], ((0, K_PAD - K_RAW), (0, 0))).astype(MXU_DTYPE)  # [128,32]
    bc = params["b_conv"].astype(jnp.float32)                                       # [1, 32]
    w1 = params["w1"].astype(MXU_DTYPE)                                             # [32, 16]
    w2e = params["gamma"].reshape(BOTTLENECK, 1) * params["w2"]                     # fold scale
    b2e = params["beta"] @ params["w2"] + params["b2"]                              # fold shift
    w2e = jnp.pad(w2e, ((0, 0), (0, OUT_LANES - NUM_CLASSES))).astype(jnp.float32)  # [16, 128]
    b2e = jnp.pad(b2e, ((0, 0), (0, OUT_LANES - NUM_CLASSES))).astype(jnp.float32)  # [1, 128]
    return wc, bc, w1, w2e, b2e


@jax.jit
def dino_forward(img_nchw, wc, bc, w1, w2e, b2e):
    """Forward pass of DiNo: netC(netB(netF(img))). Takes pre-folded parameters."""
    x = _pack_patches(img_nchw)
    vmem = pl.BlockSpec(memory_space=pltpu.MemorySpace.VMEM)
    # Total VMEM footprint is ~0.3 MiB -> single gridless invocation on all generations.
    # TODO(synk): at real backbone sizes, add a grid over the conv rows with
    # dimension_semantics=("parallel",) (v7x dual TensorCore) and re-derive tile sizes
    # against v7x's 64 MiB VMEM (32 MiB scoped default).
    out_pad = pl.pallas_call(
        _dino_kernel,
        out_shape=jax.ShapeDtypeStruct((OUT_ROWS, OUT_LANES), jnp.float32),
        in_specs=[vmem] * 6,
        out_specs=vmem,
    )(x, wc, bc, w1, w2e, b2e)
    return out_pad[:B, :NUM_CLASSES]


# ------------------------------- reference (plain JAX, unfused f32) --------------------
def dino_reference(img_nchw, params):
    x = jnp.transpose(img_nchw, (0, 2, 3, 1)).astype(jnp.float32)
    xp = jnp.pad(x, ((0, 0), (1, 1), (1, 1), (0, 0)))
    cols = [xp[:, dh:dh + H, dw:dw + W, :] for dh in range(KH) for dw in range(KW)]
    patches = jnp.concatenate(cols, axis=-1).reshape(B * H * W, KH * KW * C_IN)
    feat = jnp.maximum(patches @ params["w_conv"] + params["b_conv"], 0.0)
    pooled = feat.reshape(B, H * W, FEAT).mean(axis=1)
    h = pooled @ params["w1"] + params["b1"]
    mu = h.mean(axis=0, keepdims=True)
    var = ((h - mu) ** 2).mean(axis=0, keepdims=True)
    hbn = (h - mu) / jnp.sqrt(var + BN_EPS) * params["gamma"] + params["beta"]
    return hbn @ params["w2"] + params["b2"]


# ------------------------------- deterministic init ------------------------------------
def init_params(key):
    ks = jax.random.split(key, 8)
    fan_conv = KH * KW * C_IN
    # conv weight stored flat as [KH*KW*C_IN, FEAT] in (dh, dw, c) ordering
    w_conv = jax.random.normal(ks[0], (fan_conv, FEAT), jnp.float32) / jnp.sqrt(fan_conv)
    b_conv = 0.05 * jax.random.normal(ks[1], (1, FEAT), jnp.float32)
    w1 = jax.random.normal(ks[2], (FEAT, BOTTLENECK), jnp.float32) / jnp.sqrt(FEAT)
    # b1 deliberately non-zero: it must cancel under BN in the kernel (which drops it).
    b1 = 0.1 * jax.random.normal(ks[3], (1, BOTTLENECK), jnp.float32)
    gamma = 1.0 + 0.1 * jax.random.normal(ks[4], (1, BOTTLENECK), jnp.float32)
    beta = 0.1 * jax.random.normal(ks[5], (1, BOTTLENECK), jnp.float32)
    w2 = jax.random.normal(ks[6], (BOTTLENECK, NUM_CLASSES), jnp.float32) / jnp.sqrt(BOTTLENECK)
    b2 = 0.01 * jax.random.normal(ks[7], (1, NUM_CLASSES), jnp.float32)
    return dict(w_conv=w_conv, b_conv=b_conv, w1=w1, b1=b1,
                gamma=gamma, beta=beta, w2=w2, b2=b2)


if __name__ == "__main__":
    key = jax.random.PRNGKey(0)
    k_img, k_par = jax.random.split(key)
    img = jax.random.normal(k_img, (B, C_IN, H, W), jnp.float32)   # PyTorch-style NCHW
    params = init_params(k_par)

    # Fold/pad parameters ONCE (outside the jitted per-call forward).
    folded = fold_params(params)

    out = jax.block_until_ready(dino_forward(img, *folded))
    ref = jax.block_until_ready(dino_reference(img, params))

    assert out.shape == (B, NUM_CLASSES), out.shape
    # Tolerance: batch-2 BatchNorm normalizes by differences of only two samples, which
    # amplifies tiny floating-point reassociation deltas between kernel and reference.
    assert jnp.allclose(out, ref, rtol=1e-2, atol=1e-2), (out, ref)
    # TODO(synk): teacher/student DINO heads (dino_forward, ema_update_teacher) are not
    # part of DiNo.forward and are intentionally not implemented here.
    print("KERNEL_OK")
</pallas_src>

<mosaic_0001>
module attributes {stable_mosaic.version = 11 : i64} {
  func.func @_dino_kernel(%arg0: memref<512x128xf32, #tpu.memory_space<vmem>>, %arg1: memref<128x32xf32, #tpu.memory_space<vmem>>, %arg2: memref<1x32xf32, #tpu.memory_space<vmem>>, %arg3: memref<32x16xf32, #tpu.memory_space<vmem>>, %arg4: memref<16x128xf32, #tpu.memory_space<vmem>>, %arg5: memref<1x128xf32, #tpu.memory_space<vmem>>, %arg6: memref<8x128xf32, #tpu.memory_space<vmem>>) attributes {dimension_semantics = [], scalar_prefetch = 0 : i64, scratch_operands = 0 : i64, tpu.core_type = #tpu.core_type<tc>} {
    %c0 = arith.constant 0 : index
    %c0_0 = arith.constant 0 : index
    %0 = vector.load %arg0[%c0, %c0_0] : memref<512x128xf32, #tpu.memory_space<vmem>>, vector<512x128xf32>
    %c0_1 = arith.constant 0 : index
    %c0_2 = arith.constant 0 : index
    %1 = vector.load %arg1[%c0_1, %c0_2] : memref<128x32xf32, #tpu.memory_space<vmem>>, vector<128x32xf32>
    %cst = arith.constant dense<0.000000e+00> : vector<512x32xf32>
    %2 = tpu.matmul %0, %1, %cst {dimension_numbers = #tpu.dot_dimension_numbers<[1], [0], [0], [1], [0, 0, 1, 1], [], []>} : vector<512x128xf32>, vector<128x32xf32>, vector<512x32xf32> -> vector<512x32xf32>
    %c0_3 = arith.constant 0 : index
    %c0_4 = arith.constant 0 : index
    %3 = vector.load %arg2[%c0_3, %c0_4] : memref<1x32xf32, #tpu.memory_space<vmem>>, vector<1x32xf32>
    %4 = vector.broadcast %3 : vector<1x32xf32> to vector<512x32xf32>
    %5 = arith.addf %2, %4 : vector<512x32xf32>
    %cst_5 = arith.constant 0.000000e+00 : f32
    %6 = vector.broadcast %cst_5 : f32 to vector<512x32xf32>
    %7 = arith.maximumf %5, %6 : vector<512x32xf32>
    %8 = vector.extract_strided_slice %7 {offsets = [0, 0], sizes = [256, 32], strides = [1, 1]} : vector<512x32xf32> to vector<256x32xf32>
    %cst_6 = arith.constant dense<0.000000e+00> : vector<32xf32>
    %9 = vector.multi_reduction <add>, %8, %cst_6 [0] : vector<256x32xf32> to vector<32xf32>
    %10 = vector.shape_cast %9 : vector<32xf32> to vector<1x32xf32>
    %11 = vector.extract_strided_slice %7 {offsets = [256, 0], sizes = [256, 32], strides = [1, 1]} : vector<512x32xf32> to vector<256x32xf32>
    %cst_7 = arith.constant dense<0.000000e+00> : vector<32xf32>
    %12 = vector.multi_reduction <add>, %11, %cst_7 [0] : vector<256x32xf32> to vector<32xf32>
    %13 = vector.shape_cast %12 : vector<32xf32> to vector<1x32xf32>
    %14 = tpu.concatenate %10, %13 in 0 : vector<1x32xf32>, vector<1x32xf32> -> vector<2x32xf32>
    %cst_8 = arith.constant 3.906250e-03 : f32
    %15 = vector.broadcast %cst_8 : f32 to vector<2x32xf32>
    %16 = arith.mulf %14, %15 : vector<2x32xf32>
    %c0_9 = arith.constant 0 : index
    %c0_10 = arith.constant 0 : index
    %17 = vector.load %arg3[%c0_9, %c0_10] : memref<32x16xf32, #tpu.memory_space<vmem>>, vector<32x16xf32>
    %cst_11 = arith.constant dense<0.000000e+00> : vector<2x16xf32>
    %18 = tpu.matmul %16, %17, %cst_11 {dimension_numbers = #tpu.dot_dimension_numbers<[1], [0], [0], [1], [0, 0, 1, 1], [], []>} : vector<2x32xf32>, vector<32x16xf32>, vector<2x16xf32> -> vector<2x16xf32>
    %cst_12 = arith.constant dense<0.000000e+00> : vector<16xf32>
    %19 = vector.multi_reduction <add>, %18, %cst_12 [0] : vector<2x16xf32> to vector<16xf32>
    %20 = vector.shape_cast %19 : vector<16xf32> to vector<1x16xf32>
    %cst_13 = arith.constant 2.000000e+00 : f32
    %21 = vector.broadcast %cst_13 : f32 to vector<1x16xf32>
    %22 = arith.divf %20, %21 : vector<1x16xf32>
    %23 = vector.broadcast %22 : vector<1x16xf32> to vector<2x16xf32>
    %24 = arith.subf %18, %23 : vector<2x16xf32>
    %25 = arith.mulf %24, %24 : vector<2x16xf32>
    %cst_14 = arith.constant dense<0.000000e+00> : vector<16xf32>
    %26 = vector.multi_reduction <add>, %25, %cst_14 [0] : vector<2x16xf32> to vector<16xf32>
    %27 = vector.shape_cast %26 : vector<16xf32> to vector<1x16xf32>
    %cst_15 = arith.constant 2.000000e+00 : f32
    %28 = vector.broadcast %cst_15 : f32 to vector<1x16xf32>
    %29 = arith.divf %27, %28 : vector<1x16xf32>
    %30 = vector.broadcast %22 : vector<1x16xf32> to vector<2x16xf32>
    %31 = arith.subf %18, %30 : vector<2x16xf32>
    %cst_16 = arith.constant 9.99999974E-6 : f32
    %32 = vector.broadcast %cst_16 : f32 to vector<1x16xf32>
    %33 = arith.addf %29, %32 : vector<1x16xf32>
    %34 = math.rsqrt %33 : vector<1x16xf32>
    %35 = vector.broadcast %34 : vector<1x16xf32> to vector<2x16xf32>
    %36 = arith.mulf %31, %35 : vector<2x16xf32>
    %cst_17 = arith.constant 0.000000e+00 : f32
    %37 = vector.broadcast %cst_17 : f32 to vector<6x16xf32>
    %38 = tpu.concatenate %36, %37 in 0 : vector<2x16xf32>, vector<6x16xf32> -> vector<8x16xf32>
    %c0_18 = arith.constant 0 : index
    %c0_19 = arith.constant 0 : index
    %39 = vector.load %arg4[%c0_18, %c0_19] : memref<16x128xf32, #tpu.memory_space<vmem>>, vector<16x128xf32>
    %cst_20 = arith.constant dense<0.000000e+00> : vector<8x128xf32>
    %40 = tpu.matmul %38, %39, %cst_20 {dimension_numbers = #tpu.dot_dimension_numbers<[1], [0], [0], [1], [0, 0, 1, 1], [], []>} : vector<8x16xf32>, vector<16x128xf32>, vector<8x128xf32> -> vector<8x128xf32>
    %c0_21 = arith.constant 0 : index
    %c0_22 = arith.constant 0 : index
    %41 = vector.load %arg5[%c0_21, %c0_22] : memref<1x128xf32, #tpu.memory_space<vmem>>, vector<1x128xf32>
    %42 = vector.broadcast %41 : vector<1x128xf32> to vector<8x128xf32>
    %43 = arith.addf %40, %42 : vector<8x128xf32>
    %c0_23 = arith.constant 0 : index
    %c0_24 = arith.constant 0 : index
    %44 = vector.load %arg6[%c0_23, %c0_24] : memref<8x128xf32, #tpu.memory_space<vmem>>, vector<8x128xf32>
    tpu.vector_store %arg6[%c0_23, %c0_24], %43 {strides = array<i32>} : memref<8x128xf32, #tpu.memory_space<vmem>>, vector<8x128xf32>,
    return
  }
}

</mosaic_0001>

<llo_original>
// kernel: dino_forward.1
$region0: #{dino_forward.1}
  #allocation0 [shape = 'u32[]', space=smem, size = 0x4, offset = 0x4, fixed_abs, tag = 'smem constant byte address 0x4 - core index']
  #allocation1 [shape = 'u32[72,128]{1,0:T(1,128)}', space=vmem, size = 0x9000, scoped, tag = 'internal scratch']
  %s0 = inlined_call_operand.vmem [shape: f32[512,128], index: 0, kind: input, shape index: {}]
  %s1 = inlined_call_operand.vmem [shape: f32[128,32], index: 1, kind: input, shape index: {}]
  %s2 = inlined_call_operand.vmem [shape: f32[1,32], index: 2, kind: input, shape index: {}]
  %s3 = inlined_call_operand.vmem [shape: f32[32,16], index: 3, kind: input, shape index: {}]
  %s4 = inlined_call_operand.vmem [shape: f32[16,128], index: 4, kind: input, shape index: {}]
  %s5 = inlined_call_operand.vmem [shape: f32[1,128], index: 5, kind: input, shape index: {}]
  %s6 = inlined_call_operand.vmem [shape: f32[8,128], index: 6, kind: output, shape index: {}]
  %s7 = sld [smem:[#allocation0]]
  $region34: #{dino_forward.1} parent=0
    _
  %s9 = ssub.s32 1, %s7
  %s10 = scalar_select 0, %s9, %s7
  // Predicated region
  $region2: #{dino_forward.1} parent=0 // pred_check
    _
  $region3: #{dino_forward.1} parent=0 // pred_check_branch
    %12 = sbr.rel (0) target = $region5
  $region4: #{dino_forward.1} parent=0 // pred_region
    _
  $region5: #{dino_forward.1} parent=0 // pred_fallthru
    _
  // Predicated region
  $region6: #{dino_forward.1} parent=0 // pred_check
    _
  $region7: #{dino_forward.1} parent=0 // pred_check_branch
    %14 = sbr.rel (0) target = $region9
  $region8: #{dino_forward.1} parent=0 // pred_region
    _
  $region9: #{dino_forward.1} parent=0 // pred_fallthru
    _
  // Predicated region
  $region10: #{dino_forward.1} parent=0 // pred_check
    _
  $region11: #{dino_forward.1} parent=0 // pred_check_branch
    %16 = sbr.rel (0) target = $region13
  $region12: #{dino_forward.1} parent=0 // pred_region
    _
  $region13: #{dino_forward.1} parent=0 // pred_fallthru
    _
  // Predicated region
  $region14: #{dino_forward.1} parent=0 // pred_check
    _
  $region15: #{dino_forward.1} parent=0 // pred_check_branch
    %18 = sbr.rel (0) target = $region17
  $region16: #{dino_forward.1} parent=0 // pred_region
    _
  $region17: #{dino_forward.1} parent=0 // pred_fallthru
    _
  // Predicated region
  $region18: #{dino_forward.1} parent=0 // pred_check
    _
  $region19: #{dino_forward.1} parent=0 // pred_check_branch
    %20 = sbr.rel (0) target = $region21
  $region20: #{dino_forward.1} parent=0 // pred_region
    _
  $region21: #{dino_forward.1} parent=0 // pred_fallthru
    _
  // Predicated region
  $region22: #{dino_forward.1} parent=0 // pred_check
    _
  $region23: #{dino_forward.1} parent=0 // pred_check_branch
    %22 = sbr.rel (0) target = $region25
  $region24: #{dino_forward.1} parent=0 // pred_region
    _
  $region25: #{dino_forward.1} parent=0 // pred_fallthru
    _
  %v23 = vld [vmem:[%s0] sm:$0xff]
  %v24 = vld [vmem:[%s0 + $0x8] sm:$0xff]
  %v25 = vld [vmem:[%s0 + $0x10] sm:$0xff]
  %v26 = vld [vmem:[%s0 + $0x18] sm:$0xff]
  %v27 = vld [vmem:[%s0 + $0x20] sm:$0xff]
  %v28 = vld [vmem:[%s0 + $0x28] sm:$0xff]
  %v29 = vld [vmem:[%s0 + $0x30] sm:$0xff]
  %v30 = vld [vmem:[%s0 + $0x38] sm:$0xff]
  %v31 = vld [vmem:[%s0 + $0x40] sm:$0xff]
  %v32 = vld [vmem:[%s0 + $0x48] sm:$0xff]
  %v33 = vld [vmem:[%s0 + $0x50] sm:$0xff]
  %v34 = vld [vmem:[%s0 + $0x58] sm:$0xff]
  %v35 = vld [vmem:[%s0 + $0x60] sm:$0xff]
  %v36 = vld [vmem:[%s0 + $0x68] sm:$0xff]
  %v37 = vld [vmem:[%s0 + $0x70] sm:$0xff]
  %v38 = vld [vmem:[%s0 + $0x78] sm:$0xff]
  %v39 = vld [vmem:[%s0 + $0x80] sm:$0xff]
  %v40 = vld [vmem:[%s0 + $0x88] sm:$0xff]
  %v41 = vld [vmem:[%s0 + $0x90] sm:$0xff]
  %v42 = vld [vmem:[%s0 + $0x98] sm:$0xff]
  %v43 = vld [vmem:[%s0 + $0xa0] sm:$0xff]
  %v44 = vld [vmem:[%s0 + $0xa8] sm:$0xff]
  %v45 = vld [vmem:[%s0 + $0xb0] sm:$0xff]
  %v46 = vld [vmem:[%s0 + $0xb8] sm:$0xff]
  %v47 = vld [vmem:[%s0 + $0xc0] sm:$0xff]
  %v48 = vld [vmem:[%s0 + $0xc8] sm:$0xff]
  %v49 = vld [vmem:[%s0 + $0xd0] sm:$0xff]
  %v50 = vld [vmem:[%s0 + $0xd8] sm:$0xff]
  %v51 = vld [vmem:[%s0 + $0xe0] sm:$0xff]
  %v52 = vld [vmem:[%s0 + $0xe8] sm:$0xff]
  %v53 = vld [vmem:[%s0 + $0xf0] sm:$0xff]
  %v54 = vld [vmem:[%s0 + $0xf8] sm:$0xff]
  %v55 = vld [vmem:[%s0 + $0x100] sm:$0xff]
  %v56 = vld [vmem:[%s0 + $0x108] sm:$0xff]
  %v57 = vld [vmem:[%s0 + $0x110] sm:$0xff]
  %v58 = vld [vmem:[%s0 + $0x118] sm:$0xff]
  %v59 = vld [vmem:[%s0 + $0x120] sm:$0xff]
  %v60 = vld [vmem:[%s0 + $0x128] sm:$0xff]
  %v61 = vld [vmem:[%s0 + $0x130] sm:$0xff]
  %v62 = vld [vmem:[%s0 + $0x138] sm:$0xff]
  %v63 = vld [vmem:[%s0 + $0x140] sm:$0xff]
  %v64 = vld [vmem:[%s0 + $0x148] sm:$0xff]
  %v65 = vld [vmem:[%s0 + $0x150] sm:$0xff]
  %v66 = vld [vmem:[%s0 + $0x158] sm:$0xff]
  %v67 = vld [vmem:[%s0 + $0x160] sm:$0xff]
  %v68 = vld [vmem:[%s0 + $0x168] sm:$0xff]
  %v69 = vld [vmem:[%s0 + $0x170] sm:$0xff]
  %v70 = vld [vmem:[%s0 + $0x178] sm:$0xff]
  %v71 = vld [vmem:[%s0 + $0x180] sm:$0xff]
  %v72 = vld [vmem:[%s0 + $0x188] sm:$0xff]
  %v73 = vld [vmem:[%s0 + $0x190] sm:$0xff]
  %v74 = vld [vmem:[%s0 + $0x198] sm:$0xff]
  %v75 = vld [vmem:[%s0 + $0x1a0] sm:$0xff]
  %v76 = vld [vmem:[%s0 + $0x1a8] sm:$0xff]
  %v77 = vld [vmem:[%s0 + $0x1b0] sm:$0xff]
  %v78 = vld [vmem:[%s0 + $0x1b8] sm:$0xff]
  %v79 = vld [vmem:[%s0 + $0x1c0] sm:$0xff]
  %v80 = vld [vmem:[%s0 + $0x1c8] sm:$0xff]
  %v81 = vld [vmem:[%s0 + $0x1d0] sm:$0xff]
  %v82 = vld [vmem:[%s0 + $0x1d8] sm:$0xff]
  %v83 = vld [vmem:[%s0 + $0x1e0] sm:$0xff]
  %v84 = vld [vmem:[%s0 + $0x1e8] sm:$0xff]
  %v85 = vld [vmem:[%s0 + $0x1f0] sm:$0xff]
  %v86 = vld [vmem:[%s0 + $0x1f8] sm:$0xff]
  %v87 = vld [vmem:[%s1] sm:$0xff]
  %v88 = vld [vmem:[%s1 + $0x8] sm:$0xff]
  %v89 = vld [vmem:[%s1 + $0x10] sm:$0xff]
  %v90 = vld [vmem:[%s1 + $0x18] sm:$0xff]
  %v91 = vld [vmem:[%s1 + $0x20] sm:$0xff]
  %v92 = vld [vmem:[%s1 + $0x28] sm:$0xff]
  %v93 = vld [vmem:[%s1 + $0x30] sm:$0xff]
  %v94 = vld [vmem:[%s1 + $0x38] sm:$0xff]
  %v95 = vld [vmem:[%s1 + $0x40] sm:$0xff]
  %v96 = vld [vmem:[%s1 + $0x48] sm:$0xff]
  %v97 = vld [vmem:[%s1 + $0x50] sm:$0xff]
  %v98 = vld [vmem:[%s1 + $0x58] sm:$0xff]
  %v99 = vld [vmem:[%s1 + $0x60] sm:$0xff]
  %v100 = vld [vmem:[%s1 + $0x68] sm:$0xff]
  %v101 = vld [vmem:[%s1 + $0x70] sm:$0xff]
  %v102 = vld [vmem:[%s1 + $0x78] sm:$0xff]
  %v103 = vld [vmem:[%s2] sm:$0x1]
  %v105 = vperm.slane %v103, 0
  %107 = vmatpush.msra.mxu0 %v102
  %108 = vmatpush.msra.mxu0 %v101
  %109 = vmatpush.msra.mxu0 %v100
  %110 = vmatpush.msra.mxu0 %v99
  %111 = vmatpush.msra.mxu0 %v98
  %112 = vmatpush.msra.mxu0 %v97
  %113 = vmatpush.msra.mxu0 %v96
  %114 = vmatpush.msra.mxu0 %v95
  %115 = vmatpush.msra.mxu0 %v94
  %116 = vmatpush.msra.mxu0 %v93
  %117 = vmatpush.msra.mxu0 %v92
  %118 = vmatpush.msra.mxu0 %v91
  %119 = vmatpush.msra.mxu0 %v90
  %120 = vmatpush.msra.mxu0 %v89
  %121 = vmatpush.msra.mxu0 %v88
  %122 = vmatpush.msra.mxu0 %v87
  %123 = vmatmul.f32.gmra.mxu0 %v23
  %v124 = vpop.f32.mrf.mxu0
  %v125 = vadd.f32 %v105, %v124
  %126 = vmatmul.f32.gmra.mxu0 %v24
  %v127 = vpop.f32.mrf.mxu0
  %v128 = vadd.f32 %v105, %v127
  %129 = vmatmul.f32.gmra.mxu0 %v25
  %v130 = vpop.f32.mrf.mxu0
  %v131 = vadd.f32 %v105, %v130
  %132 = vmatmul.f32.gmra.mxu0 %v26
  %v133 = vpop.f32.mrf.mxu0
  %v134 = vadd.f32 %v105, %v133
  %135 = vmatmul.f32.gmra.mxu0 %v27
  %v136 = vpop.f32.mrf.mxu0
  %v137 = vadd.f32 %v105, %v136
  %138 = vmatmul.f32.gmra.mxu0 %v28
  %v139 = vpop.f32.mrf.mxu0
  %v140 = vadd.f32 %v105, %v139
  %141 = vmatmul.f32.gmra.mxu0 %v29
  %v142 = vpop.f32.mrf.mxu0
  %v143 = vadd.f32 %v105, %v142
  %144 = vmatmul.f32.gmra.mxu0 %v30
  %v145 = vpop.f32.mrf.mxu0
  %v146 = vadd.f32 %v105, %v145
  %147 = vmatmul.f32.gmra.mxu0 %v31
  %v148 = vpop.f32.mrf.mxu0
  %v149 = vadd.f32 %v105, %v148
  %150 = vmatmul.f32.gmra.mxu0 %v32
  %v151 = vpop.f32.mrf.mxu0
  %v152 = vadd.f32 %v105, %v151
  %153 = vmatmul.f32.gmra.mxu0 %v33
  %v154 = vpop.f32.mrf.mxu0
  %v155 = vadd.f32 %v105, %v154
  %156 = vmatmul.f32.gmra.mxu0 %v34
  %v157 = vpop.f32.mrf.mxu0
  %v158 = vadd.f32 %v105, %v157
  %159 = vmatmul.f32.gmra.mxu0 %v35
  %v160 = vpop.f32.mrf.mxu0
  %v161 = vadd.f32 %v105, %v160
  %162 = vmatmul.f32.gmra.mxu0 %v36
  %v163 = vpop.f32.mrf.mxu0
  %v164 = vadd.f32 %v105, %v163
  %165 = vmatmul.f32.gmra.mxu0 %v37
  %v166 = vpop.f32.mrf.mxu0
  %v167 = vadd.f32 %v105, %v166
  %168 = vmatmul.f32.gmra.mxu0 %v38
  %v169 = vpop.f32.mrf.mxu0
  %v170 = vadd.f32 %v105, %v169
  %171 = vmatmul.f32.gmra.mxu0 %v39
  %v172 = vpop.f32.mrf.mxu0
  %v173 = vadd.f32 %v105, %v172
  %174 = vmatmul.f32.gmra.mxu0 %v40
  %v175 = vpop.f32.mrf.mxu0
  %v176 = vadd.f32 %v105, %v175
  %177 = vmatmul.f32.gmra.mxu0 %v41
  %v178 = vpop.f32.mrf.mxu0
  %v179 = vadd.f32 %v105, %v178
  %180 = vmatmul.f32.gmra.mxu0 %v42
  %v181 = vpop.f32.mrf.mxu0
  %v182 = vadd.f32 %v105, %v181
  %183 = vmatmul.f32.gmra.mxu0 %v43
  %v184 = vpop.f32.mrf.mxu0
  %v185 = vadd.f32 %v105, %v184
  %186 = vmatmul.f32.gmra.mxu0 %v44
  %v187 = vpop.f32.mrf.mxu0
  %v188 = vadd.f32 %v105, %v187
  %189 = vmatmul.f32.gmra.mxu0 %v45
  %v190 = vpop.f32.mrf.mxu0
  %v191 = vadd.f32 %v105, %v190
  %192 = vmatmul.f32.gmra.mxu0 %v46
  %v193 = vpop.f32.mrf.mxu0
  %v194 = vadd.f32 %v105, %v193
  %195 = vmatmul.f32.gmra.mxu0 %v47
  %v196 = vpop.f32.mrf.mxu0
  %v197 = vadd.f32 %v105, %v196
  %198 = vmatmul.f32.gmra.mxu0 %v48
  %v199 = vpop.f32.mrf.mxu0
  %v200 = vadd.f32 %v105, %v199
  %201 = vmatmul.f32.gmra.mxu0 %v49
  %v202 = vpop.f32.mrf.mxu0
  %v203 = vadd.f32 %v105, %v202
  %204 = vmatmul.f32.gmra.mxu0 %v50
  %v205 = vpop.f32.mrf.mxu0
  %v206 = vadd.f32 %v105, %v205
  %207 = vmatmul.f32.gmra.mxu0 %v51
  %v208 = vpop.f32.mrf.mxu0
  %v209 = vadd.f32 %v105, %v208
  %210 = vmatmul.f32.gmra.mxu0 %v52
  %v211 = vpop.f32.mrf.mxu0
  %v212 = vadd.f32 %v105, %v211
  %213 = vmatmul.f32.gmra.mxu0 %v53
  %v214 = vpop.f32.mrf.mxu0
  %v215 = vadd.f32 %v105, %v214
  %216 = vmatmul.f32.gmra.mxu0 %v54
  %v217 = vpop.f32.mrf.mxu0
  %v218 = vadd.f32 %v105, %v217
  %219 = vmatmul.f32.gmra.mxu0 %v55
  %v220 = vpop.f32.mrf.mxu0
  %v221 = vadd.f32 %v105, %v220
  %222 = vmatmul.f32.gmra.mxu0 %v56
  %v223 = vpop.f32.mrf.mxu0
  %v224 = vadd.f32 %v105, %v223
  %225 = vmatmul.f32.gmra.mxu0 %v57
  %v226 = vpop.f32.mrf.mxu0
  %v227 = vadd.f32 %v105, %v226
  %228 = vmatmul.f32.gmra.mxu0 %v58
  %v229 = vpop.f32.mrf.mxu0
  %v230 = vadd.f32 %v105, %v229
  %231 = vmatmul.f32.gmra.mxu0 %v59
  %v232 = vpop.f32.mrf.mxu0
  %v233 = vadd.f32 %v105, %v232
  %234 = vmatmul.f32.gmra.mxu0 %v60
  %v235 = vpop.f32.mrf.mxu0
  %v236 = vadd.f32 %v105, %v235
  %237 = vmatmul.f32.gmra.mxu0 %v61
  %v238 = vpop.f32.mrf.mxu0
  %v239 = vadd.f32 %v105, %v238
  %240 = vmatmul.f32.gmra.mxu0 %v62
  %v241 = vpop.f32.mrf.mxu0
  %v242 = vadd.f32 %v105, %v241
  %243 = vmatmul.f32.gmra.mxu0 %v63
  %v244 = vpop.f32.mrf.mxu0
  %v245 = vadd.f32 %v105, %v244
  %246 = vmatmul.f32.gmra.mxu0 %v64
  %v247 = vpop.f32.mrf.mxu0
  %v248 = vadd.f32 %v105, %v247
  %249 = vmatmul.f32.gmra.mxu0 %v65
  %v250 = vpop.f32.mrf.mxu0
  %v251 = vadd.f32 %v105, %v250
  %252 = vmatmul.f32.gmra.mxu0 %v66
  %v253 = vpop.f32.mrf.mxu0
  %v254 = vadd.f32 %v105, %v253
  %255 = vmatmul.f32.gmra.mxu0 %v67
  %v256 = vpop.f32.mrf.mxu0
  %v257 = vadd.f32 %v105, %v256
  %258 = vmatmul.f32.gmra.mxu0 %v68
  %v259 = vpop.f32.mrf.mxu0
  %v260 = vadd.f32 %v105, %v259
  %261 = vmatmul.f32.gmra.mxu0 %v69
  %v262 = vpop.f32.mrf.mxu0
  %v263 = vadd.f32 %v105, %v262
  %264 = vmatmul.f32.gmra.mxu0 %v70
  %v265 = vpop.f32.mrf.mxu0
  %v266 = vadd.f32 %v105, %v265
  %267 = vmatmul.f32.gmra.mxu0 %v71
  %v268 = vpop.f32.mrf.mxu0
  %v269 = vadd.f32 %v105, %v268
  %270 = vmatmul.f32.gmra.mxu0 %v72
  %v271 = vpop.f32.mrf.mxu0
  %v272 = vadd.f32 %v105, %v271
  %273 = vmatmul.f32.gmra.mxu0 %v73
  %v274 = vpop.f32.mrf.mxu0
  %v275 = vadd.f32 %v105, %v274
  %276 = vmatmul.f32.gmra.mxu0 %v74
  %v277 = vpop.f32.mrf.mxu0
  %v278 = vadd.f32 %v105, %v277
  %279 = vmatmul.f32.gmra.mxu0 %v75
  %v280 = vpop.f32.mrf.mxu0
  %v281 = vadd.f32 %v105, %v280
  %282 = vmatmul.f32.gmra.mxu0 %v76
  %v283 = vpop.f32.mrf.mxu0
  %v284 = vadd.f32 %v105, %v283
  %285 = vmatmul.f32.gmra.mxu0 %v77
  %v286 = vpop.f32.mrf.mxu0
  %v287 = vadd.f32 %v105, %v286
  %288 = vmatmul.f32.gmra.mxu0 %v78
  %v289 = vpop.f32.mrf.mxu0
  %v290 = vadd.f32 %v105, %v289
  %291 = vmatmul.f32.gmra.mxu0 %v79
  %v292 = vpop.f32.mrf.mxu0
  %v293 = vadd.f32 %v105, %v292
  %294 = vmatmul.f32.gmra.mxu0 %v80
  %v295 = vpop.f32.mrf.mxu0
  %v296 = vadd.f32 %v105, %v295
  %297 = vmatmul.f32.gmra.mxu0 %v81
  %v298 = vpop.f32.mrf.mxu0
  %v299 = vadd.f32 %v105, %v298
  %300 = vmatmul.f32.gmra.mxu0 %v82
  %v301 = vpop.f32.mrf.mxu0
  %v302 = vadd.f32 %v105, %v301
  %303 = vmatmul.f32.gmra.mxu0 %v83
  %v304 = vpop.f32.mrf.mxu0
  %v305 = vadd.f32 %v105, %v304
  %306 = vmatmul.f32.gmra.mxu0 %v84
  %v307 = vpop.f32.mrf.mxu0
  %v308 = vadd.f32 %v105, %v307
  %309 = vmatmul.f32.gmra.mxu0 %v85
  %v310 = vpop.f32.mrf.mxu0
  %v311 = vadd.f32 %v105, %v310
  %312 = vmatmul.f32.gmra.mxu0 %v86
  %v313 = vpop.f32.mrf.mxu0
  %v314 = vadd.f32 %v105, %v313
  %315 = vdwg.mxu0
  %v316 = vmax.f32 %v125, 0.0
  %v317 = vmax.f32 %v128, 0.0
  %v318 = vmax.f32 %v131, 0.0
  %v319 = vmax.f32 %v134, 0.0
  %v320 = vmax.f32 %v137, 0.0
  %v321 = vmax.f32 %v140, 0.0
  %v322 = vmax.f32 %v143, 0.0
  %v323 = vmax.f32 %v146, 0.0
  %v324 = vmax.f32 %v149, 0.0
  %v325 = vmax.f32 %v152, 0.0
  %v326 = vmax.f32 %v155, 0.0
  %v327 = vmax.f32 %v158, 0.0
  %v328 = vmax.f32 %v161, 0.0
  %v329 = vmax.f32 %v164, 0.0
  %v330 = vmax.f32 %v167, 0.0
  %v331 = vmax.f32 %v170, 0.0
  %v332 = vmax.f32 %v173, 0.0
  %v333 = vmax.f32 %v176, 0.0
  %v334 = vmax.f32 %v179, 0.0
  %v335 = vmax.f32 %v182, 0.0
  %v336 = vmax.f32 %v185, 0.0
  %v337 = vmax.f32 %v188, 0.0
  %v338 = vmax.f32 %v191, 0.0
  %v339 = vmax.f32 %v194, 0.0
  %v340 = vmax.f32 %v197, 0.0
  %v341 = vmax.f32 %v200, 0.0
  %v342 = vmax.f32 %v203, 0.0
  %v343 = vmax.f32 %v206, 0.0
  %v344 = vmax.f32 %v209, 0.0
  %v345 = vmax.f32 %v212, 0.0
  %v346 = vmax.f32 %v215, 0.0
  %v347 = vmax.f32 %v218, 0.0
  %v348 = vmax.f32 %v221, 0.0
  %v349 = vmax.f32 %v224, 0.0
  %v350 = vmax.f32 %v227, 0.0
  %v351 = vmax.f32 %v230, 0.0
  %v352 = vmax.f32 %v233, 0.0
  %v353 = vmax.f32 %v236, 0.0
  %v354 = vmax.f32 %v239, 0.0
  %v355 = vmax.f32 %v242, 0.0
  %v356 = vmax.f32 %v245, 0.0
  %v357 = vmax.f32 %v248, 0.0
  %v358 = vmax.f32 %v251, 0.0
  %v359 = vmax.f32 %v254, 0.0
  %v360 = vmax.f32 %v257, 0.0
  %v361 = vmax.f32 %v260, 0.0
  %v362 = vmax.f32 %v263, 0.0
  %v363 = vmax.f32 %v266, 0.0
  %v364 = vmax.f32 %v269, 0.0
  %v365 = vmax.f32 %v272, 0.0
  %v366 = vmax.f32 %v275, 0.0
  %v367 = vmax.f32 %v278, 0.0
  %v368 = vmax.f32 %v281, 0.0
  %v369 = vmax.f32 %v284, 0.0
  %v370 = vmax.f32 %v287, 0.0
  %v371 = vmax.f32 %v290, 0.0
  %v372 = vmax.f32 %v293, 0.0
  %v373 = vmax.f32 %v296, 0.0
  %v374 = vmax.f32 %v299, 0.0
  %v375 = vmax.f32 %v302, 0.0
  %v376 = vmax.f32 %v305, 0.0
  %v377 = vmax.f32 %v308, 0.0
  %v378 = vmax.f32 %v311, 0.0
  %v379 = vmax.f32 %v314, 0.0
  %vm380 = vcmask 261120
  %v381 = vsel %vm380, %v316, 0.0
  %v382 = vsel %vm380, %v317, 0.0
  %v383 = vadd.f32 %v381, %v382
  %v384 = vsel %vm380, %v318, 0.0
  %v385 = vadd.f32 %v383, %v384
  %v386 = vsel %vm380, %v319, 0.0
  %v387 = vadd.f32 %v385, %v386
  %v388 = vsel %vm380, %v320, 0.0
  %v389 = vadd.f32 %v387, %v388
  %v390 = vsel %vm380, %v321, 0.0
  %v391 = vadd.f32 %v389, %v390
  %v392 = vsel %vm380, %v322, 0.0
  %v393 = vadd.f32 %v391, %v392
  %v394 = vsel %vm380, %v323, 0.0
  %v395 = vadd.f32 %v393, %v394
  %v396 = vsel %vm380, %v324, 0.0
  %v397 = vadd.f32 %v395, %v396
  %v398 = vsel %vm380, %v325, 0.0
  %v399 = vadd.f32 %v397, %v398
  %v400 = vsel %vm380, %v326, 0.0
  %v401 = vadd.f32 %v399, %v400
  %v402 = vsel %vm380, %v327, 0.0
  %v403 = vadd.f32 %v401, %v402
  %v404 = vsel %vm380, %v328, 0.0
  %v405 = vadd.f32 %v403, %v404
  %v406 = vsel %vm380, %v329, 0.0
  %v407 = vadd.f32 %v405, %v406
  %v408 = vsel %vm380, %v330, 0.0
  %v409 = vadd.f32 %v407, %v408
  %v410 = vsel %vm380, %v331, 0.0
  %v411 = vadd.f32 %v409, %v410
  %v412 = vsel %vm380, %v332, 0.0
  %v413 = vadd.f32 %v411, %v412
  %v414 = vsel %vm380, %v333, 0.0
  %v415 = vadd.f32 %v413, %v414
  %v416 = vsel %vm380, %v334, 0.0
  %v417 = vadd.f32 %v415, %v416
  %v418 = vsel %vm380, %v335, 0.0
  %v419 = vadd.f32 %v417, %v418
  %v420 = vsel %vm380, %v336, 0.0
  %v421 = vadd.f32 %v419, %v420
  %v422 = vsel %vm380, %v337, 0.0
  %v423 = vadd.f32 %v421, %v422
  %v424 = vsel %vm380, %v338, 0.0
  %v425 = vadd.f32 %v423, %v424
  %v426 = vsel %vm380, %v339, 0.0
  %v427 = vadd.f32 %v425, %v426
  %v428 = vsel %vm380, %v340, 0.0
  %v429 = vadd.f32 %v427, %v428
  %v430 = vsel %vm380, %v341, 0.0
  %v431 = vadd.f32 %v429, %v430
  %v432 = vsel %vm380, %v342, 0.0
  %v433 = vadd.f32 %v431, %v432
  %v434 = vsel %vm380, %v343, 0.0
  %v435 = vadd.f32 %v433, %v434
  %v436 = vsel %vm380, %v344, 0.0
  %v437 = vadd.f32 %v435, %v436
  %v438 = vsel %vm380, %v345, 0.0
  %v439 = vadd.f32 %v437, %v438
  %v440 = vsel %vm380, %v346, 0.0
  %v441 = vadd.f32 %v439, %v440
  %v442 = vsel %vm380, %v347, 0.0
  %v443 = vadd.f32 %v441, %v442
  %v444 = vrot.slane %v443, 4
  %v445 = vadd.f32 %v443, %v444
  %v446 = vrot.slane %v445, 2
  %v447 = vadd.f32 %v445, %v446
  %v448 = vrot.slane %v447, 1
  %v449 = vadd.f32 %v447, %v448
  %v450 = vsel %vm380, %v348, 0.0
  %v451 = vsel %vm380, %v349, 0.0
  %v452 = vadd.f32 %v450, %v451
  %v453 = vsel %vm380, %v350, 0.0
  %v454 = vadd.f32 %v452, %v453
  %v455 = vsel %vm380, %v351, 0.0
  %v456 = vadd.f32 %v454, %v455
  %v457 = vsel %vm380, %v352, 0.0
  %v458 = vadd.f32 %v456, %v457
  %v459 = vsel %vm380, %v353, 0.0
  %v460 = vadd.f32 %v458, %v459
  %v461 = vsel %vm380, %v354, 0.0
  %v462 = vadd.f32 %v460, %v461
  %v463 = vsel %vm380, %v355, 0.0
  %v464 = vadd.f32 %v462, %v463
  %v465 = vsel %vm380, %v356, 0.0
  %v466 = vadd.f32 %v464, %v465
  %v467 = vsel %vm380, %v357, 0.0
  %v468 = vadd.f32 %v466, %v467
  %v469 = vsel %vm380, %v358, 0.0
  %v470 = vadd.f32 %v468, %v469
  %v471 = vsel %vm380, %v359, 0.0
  %v472 = vadd.f32 %v470, %v471
  %v473 = vsel %vm380, %v360, 0.0
  %v474 = vadd.f32 %v472, %v473
  %v475 = vsel %vm380, %v361, 0.0
  %v476 = vadd.f32 %v474, %v475
  %v477 = vsel %vm380, %v362, 0.0
  %v478 = vadd.f32 %v476, %v477
  %v479 = vsel %vm380, %v363, 0.0
  %v480 = vadd.f32 %v478, %v479
  %v481 = vsel %vm380, %v364, 0.0
  %v482 = vadd.f32 %v480, %v481
  %v483 = vsel %vm380, %v365, 0.0
  %v484 = vadd.f32 %v482, %v483
  %v485 = vsel %vm380, %v366, 0.0
  %v486 = vadd.f32 %v484, %v485
  %v487 = vsel %vm380, %v367, 0.0
  %v488 = vadd.f32 %v486, %v487
  %v489 = vsel %vm380, %v368, 0.0
  %v490 = vadd.f32 %v488, %v489
  %v491 = vsel %vm380, %v369, 0.0
  %v492 = vadd.f32 %v490, %v491
  %v493 = vsel %vm380, %v370, 0.0
  %v494 = vadd.f32 %v492, %v493
  %v495 = vsel %vm380, %v371, 0.0
  %v496 = vadd.f32 %v494, %v495
  %v497 = vsel %vm380, %v372, 0.0
  %v498 = vadd.f32 %v496, %v497
  %v499 = vsel %vm380, %v373, 0.0
  %v500 = vadd.f32 %v498, %v499
  %v501 = vsel %vm380, %v374, 0.0
  %v502 = vadd.f32 %v500, %v501
  %v503 = vsel %vm380, %v375, 0.0
  %v504 = vadd.f32 %v502, %v503
  %v505 = vsel %vm380, %v376, 0.0
  %v506 = vadd.f32 %v504, %v505
  %v507 = vsel %vm380, %v377, 0.0
  %v508 = vadd.f32 %v506, %v507
  %v509 = vsel %vm380, %v378, 0.0
  %v510 = vadd.f32 %v508, %v509
  %v511 = vsel %vm380, %v379, 0.0
  %v512 = vadd.f32 %v510, %v511
  %v513 = vrot.slane %v512, 4
  %v514 = vadd.f32 %v512, %v513
  %v515 = vrot.slane %v514, 2
  %v516 = vadd.f32 %v514, %v515
  %v517 = vrot.slane %v516, 1
  %v518 = vadd.f32 %v516, %v517
  %vm519 = vcmask 1040384
  %v520 = vsel %vm519, %v449, %v518
  %v521 = vmul.f32 %v520, 0.00390625
  %v522 = vld [vmem:[%s3] sm:$0xff]
  %v523 = vld [vmem:[%s3 + $0x8] sm:$0xff]
  %v524 = vld [vmem:[%s3 + $0x10] sm:$0xff]
  %v525 = vld [vmem:[%s3 + $0x18] sm:$0xff]
  %v527 = vsel %vm380, %v521, 0
  %529 = vmatpush.msra.mxu0 0.0
  %530 = vmatpush.msra.mxu0 0.0
  %531 = vmatpush.msra.mxu0 0.0
  %532 = vmatpush.msra.mxu0 0.0
  %533 = vmatpush.msra.mxu0 0.0
  %534 = vmatpush.msra.mxu0 0.0
  %535 = vmatpush.msra.mxu0 0.0
  %536 = vmatpush.msra.mxu0 0.0
  %537 = vmatpush.msra.mxu0 0.0
  %538 = vmatpush.msra.mxu0 0.0
  %539 = vmatpush.msra.mxu0 0.0
  %540 = vmatpush.msra.mxu0 0.0
  %541 = vmatpush.msra.mxu0 %v525
  %542 = vmatpush.msra.mxu0 %v524
  %543 = vmatpush.msra.mxu0 %v523
  %544 = vmatpush.msra.mxu0 %v522
  %545 = vmatmul.f32.gmra.mxu0 %v527
  %v546 = vpop.f32.mrf.mxu0
  %v547 = vadd.f32 0.0, %v546
  %548 = vdwg.mxu0
  %vm549 = vcmask 123904
  %v550 = vsel %vm549, %v547, 0.0
  %v551 = vrot.slane %v550, 4
  %v552 = vadd.f32 %v550, %v551
  %v553 = vrot.slane %v552, 2
  %v554 = vadd.f32 %v552, %v553
  %v555 = vrot.slane %v554, 1
  %v556 = vadd.f32 %v554, %v555
  %v557 = vrcp.pop 2.0
  %v558 = vmul.f32 2.0, %v557
  %v559 = vsub.f32 1.0, %v558
  %v560 = vmul.f32 %v557, %v559
  %v561 = vadd.f32 %v557, %v560
  %vm562 = vweird.f32 %v557
  %v563 = vsel %vm562, %v557, %v561
  %v564 = vmul.f32 %v556, %v563
  %v565 = vsub.f32 %v547, %v564
  %v566 = vmul.f32 %v565, %v565
  %v567 = vsel %vm549, %v566, 0.0
  %v568 = vrot.slane %v567, 4
  %v569 = vadd.f32 %v567, %v568
  %v570 = vrot.slane %v569, 2
  %v571 = vadd.f32 %v569, %v570
  %v572 = vrot.slane %v571, 1
  %v573 = vadd.f32 %v571, %v572
  %v574 = vmul.f32 %v573, %v563
  %v575 = vadd.f32 %v574, 1e-05
  %v576 = vrsqrt.pop %v575
  %v577 = vmul.f32 %v576, %v575
  %v578 = vmul.f32 %v577, %v576
  %v579 = vmul.f32 0.5, %v578
  %v580 = vsub.f32 1.5, %v579
  %v581 = vmul.f32 %v576, %v580
  %vm582 = vweird.f32 %v575
  %vm583 = vweird.f32 %v576
  %vm584 = vmor %vm582, %vm583
  %v585 = vsel %vm584, %v576, %v581
  %v586 = vmul.f32 %v565, %v585
  %vm587 = vcmask 1041408
  %v588 = vsel %vm587, %v586, 0.0
  %v589 = vld [vmem:[%s4] sm:$0xff]
  %v590 = vld [vmem:[%s4 + $0x8] sm:$0xff]
  %v591 = vld [vmem:[%s5] sm:$0x1]
  %v593 = vperm.slane %v591, 0
  %vm595 = vcmask 130048
  %v597 = vsel %vm595, %v588, 0
  %599 = vmatpush.msra.mxu0 0.0
  %600 = vmatpush.msra.mxu0 0.0
  %601 = vmatpush.msra.mxu0 0.0
  %602 = vmatpush.msra.mxu0 0.0
  %603 = vmatpush.msra.mxu0 0.0
  %604 = vmatpush.msra.mxu0 0.0
  %605 = vmatpush.msra.mxu0 0.0
  %606 = vmatpush.msra.mxu0 0.0
  %607 = vmatpush.msra.mxu0 0.0
  %608 = vmatpush.msra.mxu0 0.0
  %609 = vmatpush.msra.mxu0 0.0
  %610 = vmatpush.msra.mxu0 0.0
  %611 = vmatpush.msra.mxu0 0.0
  %612 = vmatpush.msra.mxu0 0.0
  %613 = vmatpush.msra.mxu0 %v590
  %614 = vmatpush.msra.mxu0 %v589
  %615 = vmatmul.f32.gmra.mxu0 %v597
  %v616 = vpop.f32.mrf.mxu0
  %v617 = vadd.f32 %v593, %v616
  %618 = vdwg.mxu0
  %619 = vst [vmem:[%s6] sm:$0xff] %v617
  // Predicated region
  $region26: #{dino_forward.1} parent=0 // pred_check
    _
  $region27: #{dino_forward.1} parent=0 // pred_check_branch
    %621 = sbr.rel (0) target = $region29
  $region28: #{dino_forward.1} parent=0 // pred_region
    _
  $region29: #{dino_forward.1} parent=0 // pred_fallthru
    _
  // Predicated region
  $region30: #{dino_forward.1} parent=0 // pred_check
    _
  $region31: #{dino_forward.1} parent=0 // pred_check_branch
    %623 = sbr.rel (0) target = $region33
  $region32: #{dino_forward.1} parent=0 // pred_region
    _
  $region33: #{dino_forward.1} parent=0 // pred_fallthru
    _

</llo_original>
